<compile_context>
chip_gen: v6e
topology: v6e:2x2x1
jax: 0.10.0
libtpu: 0.0.40
codegen_flags: <defaults>
</compile_context>

<pallas_src>
import functools

import numpy as np
import jax
import jax.numpy as jnp
from jax.experimental import pallas as pl
from jax.experimental.pallas import tpu as pltpu


_MIB = 1024 * 1024


def _round_up(x, m):
    return ((x + m - 1) // m) * m


@functools.lru_cache(maxsize=1)
def _vmem_capacity_bytes():
    try:
        return int(pltpu.get_tpu_info().vmem_capacity_bytes)
    except Exception:
        return 64 * _MIB  # conservative (v7x-sized) fallback


def _generation_budgets():
    cap = _vmem_capacity_bytes()
    if cap <= 64 * _MIB:              # v7x-class: 64 MiB VMEM per TensorCore
        return 48 * _MIB, 8 * _MIB    # (vmem_limit cap, per-block budget)
    return 100 * _MIB, 16 * _MIB      # v5e / v6e: 128 MiB VMEM


def _divisors_desc(n):
    return [d for d in range(n, 0, -1) if n % d == 0]


def _pick_tiling(N, TC, HW, itemsize, block_budget):
    """Choose (bn, hw_b) = (images per block, lane chunk) for the streaming path."""
    tc_pad = _round_up(TC, 8)

    def padded_bytes(bn_, hw_):
        return bn_ * tc_pad * _round_up(hw_, 128) * itemsize

    if HW % 128 == 0:
        hw_cands = [h for h in range(HW, 0, -128) if HW % h == 0]  # descending
    else:
        hw_cands = [HW]
    n_divs = _divisors_desc(N)

    feasible = [(bn_, hw_) for bn_ in n_divs for hw_ in hw_cands
                if padded_bytes(bn_, hw_) <= block_budget]
    if feasible:
        bn, hw_b = max(feasible, key=lambda q: (padded_bytes(*q), q[1]))
    else:                               # even the smallest block busts the budget
        bn, hw_b = 1, hw_cands[-1]

    # Split until there are enough grid steps for pipelining (>=8) and for the
    # v7x megacore (>=2), but do not shrink useful blocks below ~budget/16.
    min_block = max(itemsize, block_budget // 16)

    def steps(bn_, hw_):
        return (N // bn_) * (HW // hw_)

    while steps(bn, hw_b) < 8:
        shrunk = False
        if bn > 1:
            nb = max(d for d in n_divs if d < bn)
            if padded_bytes(nb, hw_b) >= min_block or steps(bn, hw_b) < 2:
                bn, shrunk = nb, True
        if not shrunk and hw_b > hw_cands[-1]:
            nh = max(h for h in hw_cands if h < hw_b)
            if padded_bytes(bn, nh) >= min_block or steps(bn, hw_b) < 2:
                hw_b, shrunk = nh, True
        if not shrunk:
            break
    return bn, hw_b, padded_bytes(bn, hw_b)


def _input_spec(block_shape, index_map, depth=None):
    """BlockSpec, optionally with deeper pipelining (falls back if unsupported)."""
    if depth is not None:
        try:
            return pl.BlockSpec(block_shape, index_map,
                                pipeline_mode=pl.Buffered(depth))
        except Exception:
            pass
    return pl.BlockSpec(block_shape, index_map)


# --------------------------------------------------------------------------- #
# Kernels
# --------------------------------------------------------------------------- #
def _make_stats_kernel(bn, TC, hw_b):
    """Per-block, per-(t,c) sum and block-centered M2 (Chan partials)."""
    inv_blk = 1.0 / float(bn * hw_b)

    def _reduce_strips(x_ref, fn):
        # Reduce one (TC, hw_b) strip at a time -> live set stays one strip
        # (no block-sized x*x / centered temporaries).
        if bn <= 8:                      # short, fixed trip count: static loop
            acc = fn(x_ref[0].astype(jnp.float32))
            for i in range(1, bn):
                acc = acc + fn(x_ref[i].astype(jnp.float32))
            return acc
        init = jnp.zeros((TC, 1), jnp.float32)
        return jax.lax.fori_loop(
            0, bn, lambda i, a: a + fn(x_ref[i].astype(jnp.float32)), init)

    def stats_kernel(x_ref, s_ref, m2_ref):
        # x_ref: (bn, TC, hw_b)
        s_tc = _reduce_strips(x_ref, lambda v: jnp.sum(v, axis=1, keepdims=True))
        mean_b = s_tc * inv_blk                      # per-(t,c) block mean
        m2_tc = _reduce_strips(
            x_ref,
            lambda v: jnp.sum((v - mean_b) * (v - mean_b), axis=1, keepdims=True))
        s_ref[...] = s_tc.reshape(1, TC, 1)
        m2_ref[...] = m2_tc.reshape(1, TC, 1)

    return stats_kernel


def _apply_kernel(x_ref, a_ref, b_ref, o_ref):
    # x_ref: (bn, TC, hw_b); a_ref / b_ref: (1, TC, 1) broadcast per (t, c).
    o_ref[...] = (x_ref[...].astype(jnp.float32) * a_ref[...]
                  + b_ref[...]).astype(o_ref.dtype)


def _make_fused_kernel(count, eps):
    """Small-tensor path: stats + affine + per-timestep scale in one kernel."""
    inv_cnt = 1.0 / float(count)

    def fused_kernel(x_ref, g_ref, b_ref, p_ref, o_ref):
        xv = x_ref[...].astype(jnp.float32)                          # (N*T, C, HW)
        mean_c = jnp.sum(xv, axis=(0, 2), keepdims=True) * inv_cnt   # (1, C, 1)
        d = xv - mean_c                                              # exact two-pass
        var_c = jnp.sum(d * d, axis=(0, 2), keepdims=True) * inv_cnt
        inv_std = jax.lax.rsqrt(var_c + eps)
        scale = g_ref[...] * inv_std                                 # (1, C, 1)
        shift = b_ref[...] - mean_c * scale                          # (1, C, 1)
        o_ref[...] = ((xv * scale + shift) * p_ref[...]).astype(o_ref.dtype)

    return fused_kernel


# --------------------------------------------------------------------------- #
# Forward
# --------------------------------------------------------------------------- #
def tbn_forward(x, bn_weight, bn_bias, p, *, eps=1e-5, force_tiled=False,
                block_budget=None):
    """TBN forward (training-mode BatchNorm stats + per-timestep scale).

    x         : [N, T, C, H, W]
    bn_weight : [C]  (gamma),  bn_bias : [C]  (beta)
    p         : [T, 1, 1, 1, 1] (or anything reshaping to [T])
    """
    N, T, C, H, W = x.shape
    HW = H * W
    TC = T * C
    numel = N * T * C * HW
    itemsize = jnp.dtype(x.dtype).itemsize

    p_flat = p.reshape(-1).astype(jnp.float32)
    if p_flat.shape[0] != T:
        raise ValueError(
            f"TBN: p provides {p_flat.shape[0]} timestep scales but input has T={T}.")

    limit_cap, default_budget = _generation_budgets()
    if block_budget is None:
        block_budget = default_budget

    gamma = bn_weight.astype(jnp.float32)
    beta = bn_bias.astype(jnp.float32)

    # ---------------- small-tensor fast path: one fused kernel ----------------
    fused_bytes = (N * T) * _round_up(C, 8) * _round_up(HW, 128) * itemsize
    if (not force_tiled) and (6 * fused_bytes + 8 * _MIB) <= limit_cap:
        x_f = x.reshape(N * T, C, HW)                           # free reshape
        p_row = jnp.tile(p_flat, N).reshape(N * T, 1, 1)        # p[t] per (n,t) row
        vmem_limit = int(min(limit_cap, max(32 * _MIB, 6 * fused_bytes + 4 * _MIB)))
        out = pl.pallas_call(
            _make_fused_kernel(N * T * HW, eps),
            out_shape=jax.ShapeDtypeStruct((N * T, C, HW), x.dtype),
            compiler_params=pltpu.CompilerParams(vmem_limit_bytes=vmem_limit),
            cost_estimate=pl.CostEstimate(
                flops=int(7 * numel), transcendentals=int(C),
                bytes_accessed=int(2 * numel * itemsize)),
        )(x_f, gamma.reshape(1, C, 1), beta.reshape(1, C, 1), p_row)
        return out.reshape(N, T, C, H, W)

    # ---------------- streaming two-phase path --------------------------------
    xr = x.reshape(N, TC, HW)        # free reshape; HW lanes, T*C sublanes
    bn, hw_b, block_bytes = _pick_tiling(N, TC, HW, itemsize, block_budget)
    Gn, Gh = N // bn, HW // hw_b
    Gtot = Gn * Gh
    vmem_limit = int(min(limit_cap, max(32 * _MIB, 4 * block_bytes + 8 * _MIB)))

    # phase 1: per-(t,c) block sums + block-centered M2 (Chan partials)
    part_s, part_m2 = pl.pallas_call(
        _make_stats_kernel(bn, TC, hw_b),
        out_shape=(jax.ShapeDtypeStruct((Gtot, TC, 1), jnp.float32),
                   jax.ShapeDtypeStruct((Gtot, TC, 1), jnp.float32)),
        grid_spec=pltpu.PrefetchScalarGridSpec(
            num_scalar_prefetch=0,
            grid=(Gn, Gh),
            in_specs=[_input_spec((bn, TC, hw_b), lambda i, j: (i, 0, j), depth=3)],
            out_specs=[
                pl.BlockSpec((1, TC, 1), lambda i, j: (i * Gh + j, 0, 0)),
                pl.BlockSpec((1, TC, 1), lambda i, j: (i * Gh + j, 0, 0)),
            ],
        ),
        compiler_params=pltpu.CompilerParams(
            dimension_semantics=("parallel", "parallel"),
            vmem_limit_bytes=vmem_limit),
        cost_estimate=pl.CostEstimate(
            flops=int(4 * numel), transcendentals=0,
            bytes_accessed=int(numel * itemsize + 2 * Gtot * TC * 4)),
    )(xr)

    # finalize: Chan combine over (blocks x T) per channel, fold gamma/beta/p[t]
    cnt_g = float(bn * hw_b)
    total = float(N * T * HW)
    ps = part_s.reshape(Gtot, T, C)
    pm2 = part_m2.reshape(Gtot, T, C)
    mean_c = jnp.sum(ps, axis=(0, 1)) / total                         # (C,)
    mean_g = ps / cnt_g
    m2_c = (jnp.sum(pm2, axis=(0, 1))
            + cnt_g * jnp.sum((mean_g - mean_c) ** 2, axis=(0, 1)))
    var_c = m2_c / total                                              # biased (training)
    inv_std = jax.lax.rsqrt(var_c + eps)
    scale_c = gamma * inv_std
    shift_c = beta - mean_c * scale_c
    scale_tc = (p_flat[:, None] * scale_c[None, :]).reshape(1, TC, 1)
    shift_tc = (p_flat[:, None] * shift_c[None, :]).reshape(1, TC, 1)

    # phase 2: tiled, lane-dense elementwise apply
    out = pl.pallas_call(
        _apply_kernel,
        out_shape=jax.ShapeDtypeStruct((N, TC, HW), x.dtype),
        grid_spec=pltpu.PrefetchScalarGridSpec(
            num_scalar_prefetch=0,
            grid=(Gn, Gh),
            in_specs=[
                pl.BlockSpec((bn, TC, hw_b), lambda i, j: (i, 0, j)),
                pl.BlockSpec((1, TC, 1), lambda i, j: (0, 0, 0)),
                pl.BlockSpec((1, TC, 1), lambda i, j: (0, 0, 0)),
            ],
            out_specs=pl.BlockSpec((bn, TC, hw_b), lambda i, j: (i, 0, j)),
        ),
        compiler_params=pltpu.CompilerParams(
            dimension_semantics=("parallel", "parallel"),
            vmem_limit_bytes=vmem_limit),
        cost_estimate=pl.CostEstimate(
            flops=int(2 * numel), transcendentals=0,
            bytes_accessed=int(2 * numel * itemsize)),
    )(xr, scale_tc, shift_tc)

    return out.reshape(N, T, C, H, W)


def reference_forward(x, bn_weight, bn_bias, p, *, eps=1e-5):
    """Pure-JAX reference matching the PyTorch TBN module (training mode)."""
    N, T, C, H, W = x.shape
    mean = jnp.mean(x, axis=(0, 1, 3, 4), keepdims=True)
    var = jnp.var(x, axis=(0, 1, 3, 4), keepdims=True)    # biased
    y = (x - mean) * jax.lax.rsqrt(var + eps)
    y = y * bn_weight.reshape(1, 1, C, 1, 1) + bn_bias.reshape(1, 1, C, 1, 1)
    return y * p.reshape(1, T, 1, 1, 1)


if __name__ == "__main__":
    # Small deterministic shapes. T must be 6 (module's p has shape [6,1,1,1,1]);
    # H*W = 256 is a multiple of 128 (lane-dense last axis).
    N, T, C, H, W = 2, 6, 4, 16, 16

    key = jax.random.PRNGKey(0)
    kx, kw, kb, kp = jax.random.split(key, 4)
    # Non-zero mean to exercise the (numerically robust) variance path.
    x = 0.5 + jax.random.normal(kx, (N, T, C, H, W), jnp.float32)
    bn_weight = 1.0 + 0.1 * jax.random.normal(kw, (C,), jnp.float32)
    bn_bias = 0.1 * jax.random.normal(kb, (C,), jnp.float32)
    p = 1.0 + 0.1 * jax.random.normal(kp, (6, 1, 1, 1, 1), jnp.float32)

    ref = jax.block_until_ready(reference_forward(x, bn_weight, bn_bias, p, eps=1e-5))

    # Path 1: fused single-kernel fast path (small activation).
    fwd_fused = jax.jit(functools.partial(tbn_forward, eps=1e-5))
    out_fused = jax.block_until_ready(fwd_fused(x, bn_weight, bn_bias, p))
    assert out_fused.shape == (N, T, C, H, W), out_fused.shape
    np.testing.assert_allclose(np.asarray(out_fused), np.asarray(ref),
                               rtol=1e-3, atol=1e-3)

    # Path 2: streaming two-phase tiled path, forced with a tiny block budget so
    # the 2-D (N-chunk, HW-chunk) parallel grid is exercised at small shapes.
    fwd_tiled = jax.jit(functools.partial(tbn_forward, eps=1e-5,
                                          force_tiled=True,
                                          block_budget=64 * 1024))
    out_tiled = jax.block_until_ready(fwd_tiled(x, bn_weight, bn_bias, p))
    assert out_tiled.shape == (N, T, C, H, W), out_tiled.shape
    np.testing.assert_allclose(np.asarray(out_tiled), np.asarray(ref),
                               rtol=1e-3, atol=1e-3)

    print("KERNEL_OK")
</pallas_src>

<mosaic_0001>
module attributes {stable_mosaic.version = 11 : i64} {
  func.func @fused_kernel(%arg0: memref<12x4x256xf32, #tpu.memory_space<vmem>>, %arg1: memref<1x4x1xf32, #tpu.memory_space<vmem>>, %arg2: memref<1x4x1xf32, #tpu.memory_space<vmem>>, %arg3: memref<12x1x1xf32, #tpu.memory_space<vmem>>, %arg4: memref<12x4x256xf32, #tpu.memory_space<vmem>>) attributes {dimension_semantics = [], scalar_prefetch = 0 : i64, scratch_operands = 0 : i64, tpu.core_type = #tpu.core_type<tc>} {
    %c0 = arith.constant 0 : index
    %c0_0 = arith.constant 0 : index
    %c0_1 = arith.constant 0 : index
    %0 = vector.load %arg0[%c0, %c0_0, %c0_1] : memref<12x4x256xf32, #tpu.memory_space<vmem>>, vector<12x4x256xf32>
    %cst = arith.constant dense<0.000000e+00> : vector<4xf32>
    %1 = vector.multi_reduction <add>, %0, %cst [0, 2] : vector<12x4x256xf32> to vector<4xf32>
    %2 = vector.shape_cast %1 : vector<4xf32> to vector<1x4x1xf32>
    %cst_2 = arith.constant 3.25520843E-4 : f32
    %3 = vector.broadcast %cst_2 : f32 to vector<1x4x1xf32>
    %4 = arith.mulf %2, %3 : vector<1x4x1xf32>
    %5 = vector.broadcast %4 : vector<1x4x1xf32> to vector<12x4x256xf32>
    %6 = arith.subf %0, %5 : vector<12x4x256xf32>
    %7 = arith.mulf %6, %6 : vector<12x4x256xf32>
    %cst_3 = arith.constant dense<0.000000e+00> : vector<4xf32>
    %8 = vector.multi_reduction <add>, %7, %cst_3 [0, 2] : vector<12x4x256xf32> to vector<4xf32>
    %9 = vector.shape_cast %8 : vector<4xf32> to vector<1x4x1xf32>
    %cst_4 = arith.constant 3.25520843E-4 : f32
    %10 = vector.broadcast %cst_4 : f32 to vector<1x4x1xf32>
    %11 = arith.mulf %9, %10 : vector<1x4x1xf32>
    %cst_5 = arith.constant 9.99999974E-6 : f32
    %12 = vector.broadcast %cst_5 : f32 to vector<1x4x1xf32>
    %13 = arith.addf %11, %12 : vector<1x4x1xf32>
    %14 = math.rsqrt %13 : vector<1x4x1xf32>
    %c0_6 = arith.constant 0 : index
    %c0_7 = arith.constant 0 : index
    %c0_8 = arith.constant 0 : index
    %15 = vector.load %arg1[%c0_6, %c0_7, %c0_8] : memref<1x4x1xf32, #tpu.memory_space<vmem>>, vector<1x4x1xf32>
    %16 = arith.mulf %15, %14 : vector<1x4x1xf32>
    %c0_9 = arith.constant 0 : index
    %c0_10 = arith.constant 0 : index
    %c0_11 = arith.constant 0 : index
    %17 = vector.load %arg2[%c0_9, %c0_10, %c0_11] : memref<1x4x1xf32, #tpu.memory_space<vmem>>, vector<1x4x1xf32>
    %18 = arith.mulf %4, %16 : vector<1x4x1xf32>
    %19 = arith.subf %17, %18 : vector<1x4x1xf32>
    %20 = vector.broadcast %16 : vector<1x4x1xf32> to vector<12x4x256xf32>
    %21 = arith.mulf %0, %20 : vector<12x4x256xf32>
    %22 = vector.broadcast %19 : vector<1x4x1xf32> to vector<12x4x256xf32>
    %23 = arith.addf %21, %22 : vector<12x4x256xf32>
    %c0_12 = arith.constant 0 : index
    %c0_13 = arith.constant 0 : index
    %c0_14 = arith.constant 0 : index
    %24 = vector.load %arg3[%c0_12, %c0_13, %c0_14] : memref<12x1x1xf32, #tpu.memory_space<vmem>>, vector<12x1x1xf32>
    %25 = vector.broadcast %24 : vector<12x1x1xf32> to vector<12x4x256xf32>
    %26 = arith.mulf %23, %25 : vector<12x4x256xf32>
    %c0_15 = arith.constant 0 : index
    %c0_16 = arith.constant 0 : index
    %c0_17 = arith.constant 0 : index
    %27 = vector.load %arg4[%c0_15, %c0_16, %c0_17] : memref<12x4x256xf32, #tpu.memory_space<vmem>>, vector<12x4x256xf32>
    tpu.vector_store %arg4[%c0_15, %c0_16, %c0_17], %26 {strides = array<i32>} : memref<12x4x256xf32, #tpu.memory_space<vmem>>, vector<12x4x256xf32>,
    return
  }
}

</mosaic_0001>

<llo_original>
// kernel: tile.0
$region0: #{tile.0}
  %s0 = inlined_call_operand.vmem [shape: f32[2,6], index: 0, kind: input, shape index: {}]
  %s1 = inlined_call_operand.vmem [shape: f32[12,1,1], index: 1, kind: output, shape index: {}]
  $region1: #{tile.0} parent=0
    #allocation0 [shape = 'u8[49152]{0}', space=vmem, size = 0xc000, scoped, tag = 'scoped mem for output reshape']
    #allocation1 [shape = 'u8[4096]{0}', space=vmem, size = 0x1000, scoped, tag = 'scoped mem for input reshape']
    %s3 = sshll.u32 1, 2
    %s4 = ssub.s32 %s3, 1
    %v5 = vld [vmem:[%s0] sm:%s4]
    %6 = vst [vmem:[#allocation1] sm:%s4] %v5
    %v7 = vld [vmem:[#allocation1] sm:$0x3]
    %vm8 = vcmask 7168
    %9 = vst.msk [vmem:[#allocation0] ss:$48 sm:$0x3] %vm8, %v7
    %v10 = vld [vmem:[#allocation1] sm:$0x3]
    %11 = vrot.lane.b32.xlu0 %v10, 127
    %v12 = vpop.permute.xlu0 %11
    %vm13 = vcmask 7168
    %s14 = scalar_lea.vmem [#allocation0], 8
    %15 = vst.msk [vmem:[%s14] ss:$48 sm:$0x3] %vm13, %v12
    %s16 = scalar_lea.vmem [#allocation1], 1
    %s17 = smov 3
    %v18 = vld [vmem:[%s16] ss:$-1 sm:%s17]
    %19 = vrot.lane.b32.xlu0 %v18, 126
    %v20 = vpop.permute.xlu0 %19
    %vm21 = vcmask 7168
    %s22 = scalar_lea.vmem [#allocation0], 64
    %23 = vst.msk [vmem:[%s22] ss:$-48 sm:$0x3] %vm21, %v20
    %s24 = scalar_lea.vmem [#allocation1], 1
    %s25 = smov 3
    %v26 = vld [vmem:[%s24] ss:$-1 sm:%s25]
    %27 = vrot.lane.b32.xlu0 %v26, 125
    %v28 = vpop.permute.xlu0 %27
    %vm29 = vcmask 7168
    %s30 = scalar_lea.vmem [#allocation0], 72
    %31 = vst.msk [vmem:[%s30] ss:$-48 sm:$0x3] %vm29, %v28
    %v32 = vld [vmem:[#allocation1] sm:$0x3]
    %33 = vrot.lane.b32.xlu0 %v32, 124
    %v34 = vpop.permute.xlu0 %33
    %vm35 = vcmask 7168
    %s36 = scalar_lea.vmem [#allocation0], 32
    %37 = vst.msk [vmem:[%s36] ss:$48 sm:$0x3] %vm35, %v34
    %v38 = vld [vmem:[#allocation1] sm:$0x3]
    %39 = vrot.lane.b32.xlu0 %v38, 123
    %v40 = vpop.permute.xlu0 %39
    %vm41 = vcmask 7168
    %s42 = scalar_lea.vmem [#allocation0], 40
    %43 = vst.msk [vmem:[%s42] ss:$48 sm:$0x3] %vm41, %v40
    %s45 = sshll.u32 1, 1
    %s46 = ssub.s32 %s45, 1
    %v48 = vld [vmem:[#allocation0] sm:%s46]
    %s49 = sshll.u32 1, 1
    %s50 = ssub.s32 %s49, 1
    %51 = vst [vmem:[%s1] sm:%s50] %v48
    %s52 = scalar_lea.vmem [#allocation0], 8
    %v53 = vld [vmem:[%s52] sm:%s46]
    %s54 = sshll.u32 1, 1
    %s55 = ssub.s32 %s54, 1
    %s56 = scalar_lea.vmem %s1, 1
    %57 = vst [vmem:[%s56] sm:%s55] %v53
    %s58 = scalar_lea.vmem [#allocation0], 16
    %v59 = vld [vmem:[%s58] sm:%s46]
    %s60 = sshll.u32 1, 1
    %s61 = ssub.s32 %s60, 1
    %s62 = smul.addr 1, 2
    %s63 = scalar_lea.vmem %s1, %s62
    %64 = vst [vmem:[%s63] sm:%s61] %v59
    %s65 = scalar_lea.vmem [#allocation0], 24
    %v66 = vld [vmem:[%s65] sm:%s46]
    %s67 = sshll.u32 1, 1
    %s68 = ssub.s32 %s67, 1
    %s69 = smul.addr 1, 3
    %s70 = scalar_lea.vmem %s1, %s69
    %71 = vst [vmem:[%s70] sm:%s68] %v66
    %s72 = scalar_lea.vmem [#allocation0], 32
    %v73 = vld [vmem:[%s72] sm:%s46]
    %s74 = sshll.u32 1, 1
    %s75 = ssub.s32 %s74, 1
    %s76 = smul.addr 1, 4
    %s77 = scalar_lea.vmem %s1, %s76
    %78 = vst [vmem:[%s77] sm:%s75] %v73
    %s79 = scalar_lea.vmem [#allocation0], 40
    %v80 = vld [vmem:[%s79] sm:%s46]
    %s81 = sshll.u32 1, 1
    %s82 = ssub.s32 %s81, 1
    %s83 = smul.addr 1, 5
    %s84 = scalar_lea.vmem %s1, %s83
    %85 = vst [vmem:[%s84] sm:%s82] %v80
    %s86 = scalar_lea.vmem [#allocation0], 48
    %v87 = vld [vmem:[%s86] sm:%s46]
    %s88 = sshll.u32 1, 1
    %s89 = ssub.s32 %s88, 1
    %s90 = smul.addr 1, 6
    %s91 = scalar_lea.vmem %s1, %s90
    %92 = vst [vmem:[%s91] sm:%s89] %v87
    %s93 = scalar_lea.vmem [#allocation0], 56
    %v94 = vld [vmem:[%s93] sm:%s46]
    %s95 = sshll.u32 1, 1
    %s96 = ssub.s32 %s95, 1
    %s97 = smul.addr 1, 7
    %s98 = scalar_lea.vmem %s1, %s97
    %99 = vst [vmem:[%s98] sm:%s96] %v94
    %s100 = scalar_lea.vmem [#allocation0], 64
    %v101 = vld [vmem:[%s100] sm:%s46]
    %s102 = sshll.u32 1, 1
    %s103 = ssub.s32 %s102, 1
    %s104 = smul.addr 1, 8
    %s105 = scalar_lea.vmem %s1, %s104
    %106 = vst [vmem:[%s105] sm:%s103] %v101
    %s107 = scalar_lea.vmem [#allocation0], 72
    %v108 = vld [vmem:[%s107] sm:%s46]
    %s109 = sshll.u32 1, 1
    %s110 = ssub.s32 %s109, 1
    %s111 = smul.addr 1, 9
    %s112 = scalar_lea.vmem %s1, %s111
    %113 = vst [vmem:[%s112] sm:%s110] %v108
    %s114 = scalar_lea.vmem [#allocation0], 80
    %v115 = vld [vmem:[%s114] sm:%s46]
    %s116 = sshll.u32 1, 1
    %s117 = ssub.s32 %s116, 1
    %s118 = smul.addr 1, 10
    %s119 = scalar_lea.vmem %s1, %s118
    %120 = vst [vmem:[%s119] sm:%s117] %v115
    %s121 = scalar_lea.vmem [#allocation0], 88
    %v122 = vld [vmem:[%s121] sm:%s46]
    %s123 = sshll.u32 1, 1
    %s124 = ssub.s32 %s123, 1
    %s125 = smul.addr 1, 11
    %s126 = scalar_lea.vmem %s1, %s125
    %127 = vst [vmem:[%s126] sm:%s124] %v122

// kernel: tile.6
$region0: #{tile.6}
  #allocation0 [shape = 's32[1]{0}', space=sflag, size = 0x4, scoped, tag = 'scoped memory for tile.6']
  %s0 = inlined_call_operand.vmem [shape: f32[6], index: 0, kind: input, shape index: {}]
  %s1 = inlined_call_operand.vmem [shape: f32[2,6], index: 1, kind: output, shape index: {}]
  // Predicated region
  $region2: #{tile.6} parent=0 // pred_check
    _
  $region3: #{tile.6} parent=0 // pred_check_branch
    %3 = sbr.rel (0) target = $region5
  $region4: #{tile.6} parent=0 // pred_region
    _
  $region5: #{tile.6} parent=0 // pred_fallthru
    _
  %v4 = vld [vmem:[%s0] ss:$0 sm:$0xff]
  %5 = vst [vmem:[%s1] sm:$0x3] %v4

// kernel: tbn_forward.1
$region0: #{tbn_forward.1}
  #allocation0 [shape = 'u32[]', space=smem, size = 0x4, offset = 0x4, fixed_abs, tag = 'smem constant byte address 0x4 - core index']
  #allocation1 [shape = 'u32[144,128]{1,0:T(1,128)}', space=vmem, size = 0x12000, scoped, tag = 'internal scratch']
  %s0 = inlined_call_operand.vmem [shape: f32[12,4,256], index: 0, kind: input, shape index: {}]
  %s1 = inlined_call_operand.vmem [shape: f32[1,4,1], index: 1, kind: input, shape index: {}]
  %s2 = inlined_call_operand.vmem [shape: f32[1,4,1], index: 2, kind: input, shape index: {}]
  %s3 = inlined_call_operand.vmem [shape: f32[12,1,1], index: 3, kind: input, shape index: {}]
  %s4 = inlined_call_operand.vmem [shape: f32[12,4,256], index: 4, kind: output, shape index: {}]
  %s5 = sld [smem:[#allocation0]]
  $region26: #{tbn_forward.1} parent=0
    _
  %s7 = ssub.s32 1, %s5
  %s8 = scalar_select 0, %s7, %s5
  // Predicated region
  $region2: #{tbn_forward.1} parent=0 // pred_check
    _
  $region3: #{tbn_forward.1} parent=0 // pred_check_branch
    %10 = sbr.rel (0) target = $region5
  $region4: #{tbn_forward.1} parent=0 // pred_region
    _
  $region5: #{tbn_forward.1} parent=0 // pred_fallthru
    _
  // Predicated region
  $region6: #{tbn_forward.1} parent=0 // pred_check
    _
  $region7: #{tbn_forward.1} parent=0 // pred_check_branch
    %12 = sbr.rel (0) target = $region9
  $region8: #{tbn_forward.1} parent=0 // pred_region
    _
  $region9: #{tbn_forward.1} parent=0 // pred_fallthru
    _
  // Predicated region
  $region10: #{tbn_forward.1} parent=0 // pred_check
    _
  $region11: #{tbn_forward.1} parent=0 // pred_check_branch
    %14 = sbr.rel (0) target = $region13
  $region12: #{tbn_forward.1} parent=0 // pred_region
    _
  $region13: #{tbn_forward.1} parent=0 // pred_fallthru
    _
  // Predicated region
  $region14: #{tbn_forward.1} parent=0 // pred_check
    _
  $region15: #{tbn_forward.1} parent=0 // pred_check_branch
    %16 = sbr.rel (0) target = $region17
  $region16: #{tbn_forward.1} parent=0 // pred_region
    _
  $region17: #{tbn_forward.1} parent=0 // pred_fallthru
    _
  %v17 = vld [vmem:[%s0] sm:$0xff]
  %v18 = vld [vmem:[%s0 + $0x8] sm:$0xff]
  %v19 = vld [vmem:[%s0 + $0x10] sm:$0xff]
  %v20 = vld [vmem:[%s0 + $0x18] sm:$0xff]
  %v21 = vld [vmem:[%s0 + $0x20] sm:$0xff]
  %v22 = vld [vmem:[%s0 + $0x28] sm:$0xff]
  %v23 = vld [vmem:[%s0 + $0x30] sm:$0xff]
  %v24 = vld [vmem:[%s0 + $0x38] sm:$0xff]
  %v25 = vld [vmem:[%s0 + $0x40] sm:$0xff]
  %v26 = vld [vmem:[%s0 + $0x48] sm:$0xff]
  %v27 = vld [vmem:[%s0 + $0x50] sm:$0xff]
  %v28 = vld [vmem:[%s0 + $0x58] sm:$0xff]
  %v41 = vcombine.high %v17, %v17
  %v42 = vcombine.high %v18, %v18
  %v43 = vcombine.high %v19, %v19
  %v44 = vcombine.high %v20, %v20
  %v45 = vcombine.high %v21, %v21
  %v46 = vcombine.high %v22, %v22
  %v47 = vcombine.high %v23, %v23
  %v48 = vcombine.high %v24, %v24
  %v49 = vcombine.high %v25, %v25
  %v50 = vcombine.high %v26, %v26
  %v51 = vcombine.high %v27, %v27
  %v52 = vcombine.high %v28, %v28
  %vm65 = vcmask 1043456
  %v66 = vsel %vm65, %v17, 0.0
  %v67 = vsel %vm65, %v41, 0.0
  %v68 = vadd.f32 %v66, %v67
  %v69 = vsel %vm65, %v18, 0.0
  %v70 = vadd.f32 %v68, %v69
  %v71 = vsel %vm65, %v42, 0.0
  %v72 = vadd.f32 %v70, %v71
  %v73 = vsel %vm65, %v19, 0.0
  %v74 = vadd.f32 %v72, %v73
  %v75 = vsel %vm65, %v43, 0.0
  %v76 = vadd.f32 %v74, %v75
  %v77 = vsel %vm65, %v20, 0.0
  %v78 = vadd.f32 %v76, %v77
  %v79 = vsel %vm65, %v44, 0.0
  %v80 = vadd.f32 %v78, %v79
  %v81 = vsel %vm65, %v21, 0.0
  %v82 = vadd.f32 %v80, %v81
  %v83 = vsel %vm65, %v45, 0.0
  %v84 = vadd.f32 %v82, %v83
  %v85 = vsel %vm65, %v22, 0.0
  %v86 = vadd.f32 %v84, %v85
  %v87 = vsel %vm65, %v46, 0.0
  %v88 = vadd.f32 %v86, %v87
  %v89 = vsel %vm65, %v23, 0.0
  %v90 = vadd.f32 %v88, %v89
  %v91 = vsel %vm65, %v47, 0.0
  %v92 = vadd.f32 %v90, %v91
  %v93 = vsel %vm65, %v24, 0.0
  %v94 = vadd.f32 %v92, %v93
  %v95 = vsel %vm65, %v48, 0.0
  %v96 = vadd.f32 %v94, %v95
  %v97 = vsel %vm65, %v25, 0.0
  %v98 = vadd.f32 %v96, %v97
  %v99 = vsel %vm65, %v49, 0.0
  %v100 = vadd.f32 %v98, %v99
  %v101 = vsel %vm65, %v26, 0.0
  %v102 = vadd.f32 %v100, %v101
  %v103 = vsel %vm65, %v50, 0.0
  %v104 = vadd.f32 %v102, %v103
  %v105 = vsel %vm65, %v27, 0.0
  %v106 = vadd.f32 %v104, %v105
  %v107 = vsel %vm65, %v51, 0.0
  %v108 = vadd.f32 %v106, %v107
  %v109 = vsel %vm65, %v28, 0.0
  %v110 = vadd.f32 %v108, %v109
  %v111 = vsel %vm65, %v52, 0.0
  %v112 = vadd.f32 %v110, %v111
  %113 = vadd.xlane.f32.xlu0 %v112
  %v114 = vpop.xlane.xlu0 %113
  %v115 = vmul.f32 %v114, 0.00032552084
  %v118 = vunpack.c.l.s4 839922192
  %v119 = vunpack.c.0.s8 %v118
  %v120 = vlaneseq
  %v121 = vshrl.u32 %v120, 7
  %v122 = vsub.s32 %v119, %v121
  %v123 = vrot.slane %v115, %v122
  %v125 = vsub.f32 %v17, %v123
  %v126 = vsub.f32 %v18, %v123
  %v127 = vsub.f32 %v19, %v123
  %v128 = vsub.f32 %v20, %v123
  %v129 = vsub.f32 %v21, %v123
  %v130 = vsub.f32 %v22, %v123
  %v131 = vsub.f32 %v23, %v123
  %v132 = vsub.f32 %v24, %v123
  %v133 = vsub.f32 %v25, %v123
  %v134 = vsub.f32 %v26, %v123
  %v135 = vsub.f32 %v27, %v123
  %v136 = vsub.f32 %v28, %v123
  %v137 = vmul.f32 %v125, %v125
  %v138 = vmul.f32 %v126, %v126
  %v139 = vmul.f32 %v127, %v127
  %v140 = vmul.f32 %v128, %v128
  %v141 = vmul.f32 %v129, %v129
  %v142 = vmul.f32 %v130, %v130
  %v143 = vmul.f32 %v131, %v131
  %v144 = vmul.f32 %v132, %v132
  %v145 = vmul.f32 %v133, %v133
  %v146 = vmul.f32 %v134, %v134
  %v147 = vmul.f32 %v135, %v135
  %v148 = vmul.f32 %v136, %v136
  %v161 = vcombine.high %v137, %v137
  %v162 = vcombine.high %v138, %v138
  %v163 = vcombine.high %v139, %v139
  %v164 = vcombine.high %v140, %v140
  %v165 = vcombine.high %v141, %v141
  %v166 = vcombine.high %v142, %v142
  %v167 = vcombine.high %v143, %v143
  %v168 = vcombine.high %v144, %v144
  %v169 = vcombine.high %v145, %v145
  %v170 = vcombine.high %v146, %v146
  %v171 = vcombine.high %v147, %v147
  %v172 = vcombine.high %v148, %v148
  %v185 = vsel %vm65, %v137, 0.0
  %v186 = vsel %vm65, %v161, 0.0
  %v187 = vadd.f32 %v185, %v186
  %v188 = vsel %vm65, %v138, 0.0
  %v189 = vadd.f32 %v187, %v188
  %v190 = vsel %vm65, %v162, 0.0
  %v191 = vadd.f32 %v189, %v190
  %v192 = vsel %vm65, %v139, 0.0
  %v193 = vadd.f32 %v191, %v192
  %v194 = vsel %vm65, %v163, 0.0
  %v195 = vadd.f32 %v193, %v194
  %v196 = vsel %vm65, %v140, 0.0
  %v197 = vadd.f32 %v195, %v196
  %v198 = vsel %vm65, %v164, 0.0
  %v199 = vadd.f32 %v197, %v198
  %v200 = vsel %vm65, %v141, 0.0
  %v201 = vadd.f32 %v199, %v200
  %v202 = vsel %vm65, %v165, 0.0
  %v203 = vadd.f32 %v201, %v202
  %v204 = vsel %vm65, %v142, 0.0
  %v205 = vadd.f32 %v203, %v204
  %v206 = vsel %vm65, %v166, 0.0
  %v207 = vadd.f32 %v205, %v206
  %v208 = vsel %vm65, %v143, 0.0
  %v209 = vadd.f32 %v207, %v208
  %v210 = vsel %vm65, %v167, 0.0
  %v211 = vadd.f32 %v209, %v210
  %v212 = vsel %vm65, %v144, 0.0
  %v213 = vadd.f32 %v211, %v212
  %v214 = vsel %vm65, %v168, 0.0
  %v215 = vadd.f32 %v213, %v214
  %v216 = vsel %vm65, %v145, 0.0
  %v217 = vadd.f32 %v215, %v216
  %v218 = vsel %vm65, %v169, 0.0
  %v219 = vadd.f32 %v217, %v218
  %v220 = vsel %vm65, %v146, 0.0
  %v221 = vadd.f32 %v219, %v220
  %v222 = vsel %vm65, %v170, 0.0
  %v223 = vadd.f32 %v221, %v222
  %v224 = vsel %vm65, %v147, 0.0
  %v225 = vadd.f32 %v223, %v224
  %v226 = vsel %vm65, %v171, 0.0
  %v227 = vadd.f32 %v225, %v226
  %v228 = vsel %vm65, %v148, 0.0
  %v229 = vadd.f32 %v227, %v228
  %v230 = vsel %vm65, %v172, 0.0
  %v231 = vadd.f32 %v229, %v230
  %232 = vadd.xlane.f32.xlu0 %v231
  %v233 = vpop.xlane.xlu0 %232
  %v234 = vmul.f32 %v233, 0.00032552084
  %v235 = vadd.f32 %v234, 1e-05
  %v236 = vrsqrt.pop %v235
  %v237 = vld [vmem:[%s1] sm:$0xf]
  %v238 = vmul.f32 %v237, %v236
  %v239 = vld [vmem:[%s2] sm:$0xf]
  %v240 = vmul.f32 %v115, %v238
  %v241 = vsub.f32 %v239, %v240
  %243 = vset.pattern.permute.xlu0 0
  %244 = vperm.xlu0 %243, %v238
  %v245 = vpop.permute.xlu0 %244
  %v247 = vunpack.c.l.s4 839922192
  %v248 = vunpack.c.0.s8 %v247
  %v249 = vlaneseq
  %v250 = vshrl.u32 %v249, 7
  %v251 = vsub.s32 %v248, %v250
  %v252 = vrot.slane %v245, %v251
  %v254 = vmul.f32 %v17, %v252
  %v255 = vmul.f32 %v18, %v252
  %v256 = vmul.f32 %v19, %v252
  %v257 = vmul.f32 %v20, %v252
  %v258 = vmul.f32 %v21, %v252
  %v259 = vmul.f32 %v22, %v252
  %v260 = vmul.f32 %v23, %v252
  %v261 = vmul.f32 %v24, %v252
  %v262 = vmul.f32 %v25, %v252
  %v263 = vmul.f32 %v26, %v252
  %v264 = vmul.f32 %v27, %v252
  %v265 = vmul.f32 %v28, %v252
  %267 = vset.pattern.permute.xlu0 0
  %268 = vperm.xlu0 %267, %v241
  %v269 = vpop.permute.xlu0 %268
  %v271 = vunpack.c.l.s4 839922192
  %v272 = vunpack.c.0.s8 %v271
  %v273 = vlaneseq
  %v274 = vshrl.u32 %v273, 7
  %v275 = vsub.s32 %v272, %v274
  %v276 = vrot.slane %v269, %v275
  %v278 = vadd.f32 %v254, %v276
  %v279 = vadd.f32 %v255, %v276
  %v280 = vadd.f32 %v256, %v276
  %v281 = vadd.f32 %v257, %v276
  %v282 = vadd.f32 %v258, %v276
  %v283 = vadd.f32 %v259, %v276
  %v284 = vadd.f32 %v260, %v276
  %v285 = vadd.f32 %v261, %v276
  %v286 = vadd.f32 %v262, %v276
  %v287 = vadd.f32 %v263, %v276
  %v288 = vadd.f32 %v264, %v276
  %v289 = vadd.f32 %v265, %v276
  %v290 = vld [vmem:[%s3] sm:$0x1]
  %v291 = vld [vmem:[%s3 + $0x1] sm:$0x1]
  %v292 = vld [vmem:[%s3 + $0x2] sm:$0x1]
  %v293 = vld [vmem:[%s3 + $0x3] sm:$0x1]
  %v294 = vld [vmem:[%s3 + $0x4] sm:$0x1]
  %v295 = vld [vmem:[%s3 + $0x5] sm:$0x1]
  %v296 = vld [vmem:[%s3 + $0x6] sm:$0x1]
  %v297 = vld [vmem:[%s3 + $0x7] sm:$0x1]
  %v298 = vld [vmem:[%s3 + $0x8] sm:$0x1]
  %v299 = vld [vmem:[%s3 + $0x9] sm:$0x1]
  %v300 = vld [vmem:[%s3 + $0xa] sm:$0x1]
  %v301 = vld [vmem:[%s3 + $0xb] sm:$0x1]
  %v314 = vlaneseq
  %v315 = vshrl.u32 %v314, 7
  %v316 = vsub.s32 0, %v315
  %v317 = vrot.slane %v290, %v316
  %v318 = vlaneseq
  %v319 = vshrl.u32 %v318, 7
  %v320 = vsub.s32 0, %v319
  %v321 = vrot.slane %v291, %v320
  %v322 = vlaneseq
  %v323 = vshrl.u32 %v322, 7
  %v324 = vsub.s32 0, %v323
  %v325 = vrot.slane %v292, %v324
  %v326 = vlaneseq
  %v327 = vshrl.u32 %v326, 7
  %v328 = vsub.s32 0, %v327
  %v329 = vrot.slane %v293, %v328
  %v330 = vlaneseq
  %v331 = vshrl.u32 %v330, 7
  %v332 = vsub.s32 0, %v331
  %v333 = vrot.slane %v294, %v332
  %v334 = vlaneseq
  %v335 = vshrl.u32 %v334, 7
  %v336 = vsub.s32 0, %v335
  %v337 = vrot.slane %v295, %v336
  %v338 = vlaneseq
  %v339 = vshrl.u32 %v338, 7
  %v340 = vsub.s32 0, %v339
  %v341 = vrot.slane %v296, %v340
  %v342 = vlaneseq
  %v343 = vshrl.u32 %v342, 7
  %v344 = vsub.s32 0, %v343
  %v345 = vrot.slane %v297, %v344
  %v346 = vlaneseq
  %v347 = vshrl.u32 %v346, 7
  %v348 = vsub.s32 0, %v347
  %v349 = vrot.slane %v298, %v348
  %v350 = vlaneseq
  %v351 = vshrl.u32 %v350, 7
  %v352 = vsub.s32 0, %v351
  %v353 = vrot.slane %v299, %v352
  %v354 = vlaneseq
  %v355 = vshrl.u32 %v354, 7
  %v356 = vsub.s32 0, %v355
  %v357 = vrot.slane %v300, %v356
  %v358 = vlaneseq
  %v359 = vshrl.u32 %v358, 7
  %v360 = vsub.s32 0, %v359
  %v361 = vrot.slane %v301, %v360
  %362 = vset.pattern.permute.xlu0 0
  %363 = vperm.xlu0 %362, %v317
  %v364 = vpop.permute.xlu0 %363
  %366 = vset.pattern.permute.xlu0 0
  %367 = vperm.xlu0 %366, %v321
  %v368 = vpop.permute.xlu0 %367
  %370 = vset.pattern.permute.xlu0 0
  %371 = vperm.xlu0 %370, %v325
  %v372 = vpop.permute.xlu0 %371
  %374 = vset.pattern.permute.xlu0 0
  %375 = vperm.xlu0 %374, %v329
  %v376 = vpop.permute.xlu0 %375
  %378 = vset.pattern.permute.xlu0 0
  %379 = vperm.xlu0 %378, %v333
  %v380 = vpop.permute.xlu0 %379
  %382 = vset.pattern.permute.xlu0 0
  %383 = vperm.xlu0 %382, %v337
  %v384 = vpop.permute.xlu0 %383
  %386 = vset.pattern.permute.xlu0 0
  %387 = vperm.xlu0 %386, %v341
  %v388 = vpop.permute.xlu0 %387
  %390 = vset.pattern.permute.xlu0 0
  %391 = vperm.xlu0 %390, %v345
  %v392 = vpop.permute.xlu0 %391
  %394 = vset.pattern.permute.xlu0 0
  %395 = vperm.xlu0 %394, %v349
  %v396 = vpop.permute.xlu0 %395
  %398 = vset.pattern.permute.xlu0 0
  %399 = vperm.xlu0 %398, %v353
  %v400 = vpop.permute.xlu0 %399
  %402 = vset.pattern.permute.xlu0 0
  %403 = vperm.xlu0 %402, %v357
  %v404 = vpop.permute.xlu0 %403
  %406 = vset.pattern.permute.xlu0 0
  %407 = vperm.xlu0 %406, %v361
  %v408 = vpop.permute.xlu0 %407
  %v410 = vmul.f32 %v278, %v364
  %v411 = vmul.f32 %v279, %v368
  %v412 = vmul.f32 %v280, %v372
  %v413 = vmul.f32 %v281, %v376
  %v414 = vmul.f32 %v282, %v380
  %v415 = vmul.f32 %v283, %v384
  %v416 = vmul.f32 %v284, %v388
  %v417 = vmul.f32 %v285, %v392
  %v418 = vmul.f32 %v286, %v396
  %v419 = vmul.f32 %v287, %v400
  %v420 = vmul.f32 %v288, %v404
  %v421 = vmul.f32 %v289, %v408
  %422 = vst [vmem:[%s4] sm:$0xff] %v410
  %423 = vst [vmem:[%s4 + $0x8] sm:$0xff] %v411
  %424 = vst [vmem:[%s4 + $0x10] sm:$0xff] %v412
  %425 = vst [vmem:[%s4 + $0x18] sm:$0xff] %v413
  %426 = vst [vmem:[%s4 + $0x20] sm:$0xff] %v414
  %427 = vst [vmem:[%s4 + $0x28] sm:$0xff] %v415
  %428 = vst [vmem:[%s4 + $0x30] sm:$0xff] %v416
  %429 = vst [vmem:[%s4 + $0x38] sm:$0xff] %v417
  %430 = vst [vmem:[%s4 + $0x40] sm:$0xff] %v418
  %431 = vst [vmem:[%s4 + $0x48] sm:$0xff] %v419
  %432 = vst [vmem:[%s4 + $0x50] sm:$0xff] %v420
  %433 = vst [vmem:[%s4 + $0x58] sm:$0xff] %v421
  // Predicated region
  $region18: #{tbn_forward.1} parent=0 // pred_check
    _
  $region19: #{tbn_forward.1} parent=0 // pred_check_branch
    %435 = sbr.rel (0) target = $region21
  $region20: #{tbn_forward.1} parent=0 // pred_region
    _
  $region21: #{tbn_forward.1} parent=0 // pred_fallthru
    _
  // Predicated region
  $region22: #{tbn_forward.1} parent=0 // pred_check
    _
  $region23: #{tbn_forward.1} parent=0 // pred_check_branch
    %437 = sbr.rel (0) target = $region25
  $region24: #{tbn_forward.1} parent=0 // pred_region
    _
  $region25: #{tbn_forward.1} parent=0 // pred_fallthru
    _

</llo_original>
